<compile_context>
chip_gen: v5e
topology: v5e:2x2
jax: 0.10.0
libtpu: 0.0.40
codegen_flags: <defaults>
</compile_context>

<pallas_src>
import functools

import jax
import jax.numpy as jnp
from jax.experimental import pallas as pl
from jax.experimental.pallas import tpu as pltpu


def _round_up(x, m):
    return (x + m - 1) // m * m


def _single_step_kernel(*refs, variational):
    """Fused linear forward, reduction dim fits in one tile (2-D grid).

    refs (variational): x_ref (tm,tk), w_ref (tk,tn), s_ref (1,tn), b_ref (1,tn),
                        o_ref (tm,tn)
    refs (otherwise):   same, without s_ref.
    """
    if variational:
        x_ref, w_ref, s_ref, b_ref, o_ref = refs
    else:
        x_ref, w_ref, b_ref, o_ref = refs
        s_ref = None

    acc = jnp.dot(x_ref[...], w_ref[...], preferred_element_type=jnp.float32)
    if variational:
        # per-output-column {0, 1/(1-p)} scale; exact because a diagonal scale
        # of the weight rows commutes with the matmul.
        acc = acc * s_ref[...].astype(jnp.float32)
    o_ref[...] = (acc + b_ref[...].astype(jnp.float32)).astype(o_ref.dtype)


def _multi_step_kernel(*refs, variational):
    """Fused linear forward with K-reduction over grid axis 2 (3-D grid).

    refs (variational): x_ref (tm,tk), w_ref (tk,tn), s_ref (1,tn), b_ref (1,tn),
                        o_ref (tm,tn), acc_ref (tm,tn) f32 scratch
    refs (otherwise):   same, without s_ref.
    """
    if variational:
        x_ref, w_ref, s_ref, b_ref, o_ref, acc_ref = refs
    else:
        x_ref, w_ref, b_ref, o_ref, acc_ref = refs
        s_ref = None

    @pl.when(pl.program_id(2) == 0)
    def _init():
        acc_ref[...] = jnp.zeros_like(acc_ref)

    acc_ref[...] += jnp.dot(x_ref[...], w_ref[...],
                            preferred_element_type=jnp.float32)

    @pl.when(pl.program_id(2) == pl.num_programs(2) - 1)
    def _finalize():
        acc = acc_ref[...]
        if variational:
            acc = acc * s_ref[...].astype(jnp.float32)
        o_ref[...] = (acc + b_ref[...].astype(jnp.float32)).astype(o_ref.dtype)


def weight_drop_linear(x, weight_raw, bias, key, *, dropout=0.5,
                       variational=False, training=True,
                       tm=256, tn=256, tk=512, collapse_k_threshold=4096):
    """JAX wrapper: WeightDrop(nn.Linear(I, O), ['weight'], dropout).forward(x)."""
    B, I = x.shape
    O, I2 = weight_raw.shape
    assert I == I2, "in_features mismatch"
    assert bias.shape == (O,), "bias shape mismatch"

    apply_dropout = bool(training) and float(dropout) > 0.0
    use_var = apply_dropout and variational
    inv_keep = 1.0 / (1.0 - float(dropout)) if apply_dropout else 1.0

    w_eff = weight_raw
    row_scale = None
    if apply_dropout:
        if variational:
            # per-output-row {0, 1/(1-p)} scale, applied to the f32 accumulator
            # at finalize -> no per-K-step mask work in the kernel.
            keep = jax.random.bernoulli(key, 1.0 - float(dropout), (O, 1))
            row_scale = jnp.where(keep, inv_keep, 0.0).astype(jnp.float32).reshape(1, O)
        else:
            # fold mask + scale into the weight once; XLA fuses this with the
            # bernoulli producer, so the kernel streams only one weight-sized array.
            keep = jax.random.bernoulli(key, 1.0 - float(dropout), (O, I))
            w_eff = weight_raw * jnp.where(keep, inv_keep, 0.0).astype(weight_raw.dtype)

    # one-time transpose to (I, O): canonical (tm,tk) x (tk,tn) MXU matmul.
    wT = w_eff.T

    # --- tile selection -------------------------------------------------------
    itemsize = jnp.dtype(x.dtype).itemsize
    sub = {1: 32, 2: 16}.get(itemsize, 8)            # dtype-aware sublane packing
    tm = min(_round_up(tm, sub), _round_up(B, sub))
    tn = min(_round_up(tn, 128), _round_up(O, 128))

    Ip128 = _round_up(I, 128)
    if Ip128 <= collapse_k_threshold:
        tk = Ip128                                    # collapse the K grid axis
    else:
        tk = min(_round_up(tk, 128), Ip128)

    # megacore: if the batch gives a single i-tile, try to split N so both
    # v7x TensorCores get a "parallel" j-tile.
    if _round_up(B, tm) == tm and _round_up(O, 128) >= 256:
        tn = min(tn, _round_up(_round_up(O, 128) // 2, 128))

    Bp, Op, Ip = _round_up(B, tm), _round_up(O, tn), _round_up(I, tk)

    # --- pad only when needed -------------------------------------------------
    xp = x if (Bp == B and Ip == I) else jnp.pad(x, ((0, Bp - B), (0, Ip - I)))
    wp = wT if (Ip == I and Op == O) else jnp.pad(wT, ((0, Ip - I), (0, Op - O)))
    bp = bias.reshape(1, O) if Op == O else jnp.pad(bias, (0, Op - O)).reshape(1, Op)
    if use_var and Op != O:
        row_scale = jnp.pad(row_scale, ((0, 0), (0, Op - O)))

    single_k = (Ip == tk)

    # --- grid / specs ---------------------------------------------------------
    if single_k:
        grid = (Bp // tm, Op // tn)
        in_specs = [pl.BlockSpec((tm, tk), lambda i, j: (i, 0)),
                    pl.BlockSpec((tk, tn), lambda i, j: (0, j))]
        inputs = [xp, wp]
        if use_var:
            in_specs.append(pl.BlockSpec((1, tn), lambda i, j: (0, j)))
            inputs.append(row_scale)
        in_specs.append(pl.BlockSpec((1, tn), lambda i, j: (0, j)))
        inputs.append(bp)
        out_spec = pl.BlockSpec((tm, tn), lambda i, j: (i, j))
        kernel = functools.partial(_single_step_kernel, variational=use_var)
        scratch = []
        dims = ("parallel", "parallel")
    else:
        grid = (Bp // tm, Op // tn, Ip // tk)
        in_specs = [pl.BlockSpec((tm, tk), lambda i, j, k: (i, k)),
                    pl.BlockSpec((tk, tn), lambda i, j, k: (k, j))]
        inputs = [xp, wp]
        if use_var:
            in_specs.append(pl.BlockSpec((1, tn), lambda i, j, k: (0, j)))
            inputs.append(row_scale)
        in_specs.append(pl.BlockSpec((1, tn), lambda i, j, k: (0, j)))
        inputs.append(bp)
        out_spec = pl.BlockSpec((tm, tn), lambda i, j, k: (i, j))
        kernel = functools.partial(_multi_step_kernel, variational=use_var)
        scratch = [pltpu.VMEM((tm, tn), jnp.float32)]
        dims = ("parallel", "parallel", "arbitrary")

    # VMEM footprint estimate (double-buffered tiles + f32 accumulator). Only
    # raise the scoped limit if the estimate exceeds the default; never request
    # all of v7x's 64 MiB per-core VMEM.
    est = 2 * (tm * tk + tk * tn + tm * tn + 2 * tn) * itemsize + tm * tn * 4
    vmem_limit = None
    if est > 24 * 1024 * 1024:
        vmem_limit = min(48 * 1024 * 1024, int(est * 3 // 2))

    out = pl.pallas_call(
        kernel,
        out_shape=jax.ShapeDtypeStruct((Bp, Op), x.dtype),
        grid=grid,
        in_specs=in_specs,
        out_specs=out_spec,
        scratch_shapes=scratch,
        compiler_params=pltpu.CompilerParams(
            dimension_semantics=dims,
            vmem_limit_bytes=vmem_limit),
    )(*inputs)

    return out if (Bp == B and Op == O) else out[:B, :O]


if __name__ == "__main__":
    # Small shapes consistent with WeightDrop(nn.Linear(I, O)): batch=8,
    # in_features=256, out_features=128.
    B, I, O = 8, 256, 128
    key = jax.random.PRNGKey(0)
    kx, kw, kb, kd = jax.random.split(key, 4)

    bound = 1.0 / (I ** 0.5)
    x = jax.random.normal(kx, (B, I), dtype=jnp.float32)
    weight_raw = jax.random.uniform(kw, (O, I), dtype=jnp.float32,
                                    minval=-bound, maxval=bound)
    bias = jax.random.uniform(kb, (O,), dtype=jnp.float32,
                              minval=-bound, maxval=bound)

    p = 0.5
    inv_keep = 1.0 / (1.0 - p)

    # 1) standard (non-variational) weight dropout, training mode (K collapsed)
    y = weight_drop_linear(x, weight_raw, bias, kd, dropout=p,
                           variational=False, training=True)
    jax.block_until_ready(y)
    keep = jax.random.bernoulli(kd, 1.0 - p, (O, I))
    w_drop = jnp.where(keep, inv_keep, 0.0).astype(jnp.float32) * weight_raw
    ref = x @ w_drop.T + bias
    assert y.shape == (B, O)
    assert jnp.allclose(y, ref, atol=1e-4, rtol=1e-4)

    # 2) variational (per-output-row mask) weight dropout, training mode
    y_var = weight_drop_linear(x, weight_raw, bias, kd, dropout=p,
                               variational=True, training=True)
    jax.block_until_ready(y_var)
    keep_v = jax.random.bernoulli(kd, 1.0 - p, (O, 1))
    w_var = jnp.where(keep_v, inv_keep, 0.0).astype(jnp.float32) * weight_raw
    ref_var = x @ w_var.T + bias
    assert y_var.shape == (B, O)
    assert jnp.allclose(y_var, ref_var, atol=1e-4, rtol=1e-4)

    # 3) eval mode -> dropout is identity on the weight
    y_eval = weight_drop_linear(x, weight_raw, bias, kd, dropout=p,
                                variational=False, training=False)
    jax.block_until_ready(y_eval)
    ref_eval = x @ weight_raw.T + bias
    assert jnp.allclose(y_eval, ref_eval, atol=1e-4, rtol=1e-4)

    # 4) force the multi-K-step (accumulator) path: tk=128 -> 2-step reduction
    y_mk = weight_drop_linear(x, weight_raw, bias, kd, dropout=p,
                              variational=True, training=True,
                              tk=128, collapse_k_threshold=0)
    jax.block_until_ready(y_mk)
    assert jnp.allclose(y_mk, ref_var, atol=1e-4, rtol=1e-4)

    print("KERNEL_OK")
</pallas_src>

<mosaic_0001>
module attributes {stable_mosaic.version = 11 : i64} {
  func.func @_single_step_kernel(%arg0: i32, %arg1: i32, %arg2: memref<8x256xf32, #tpu.memory_space<vmem>>, %arg3: memref<256x128xf32, #tpu.memory_space<vmem>>, %arg4: memref<1x128xf32, #tpu.memory_space<vmem>>, %arg5: memref<8x128xf32, #tpu.memory_space<vmem>>) attributes {dimension_semantics = [#tpu.dimension_semantics<parallel>, #tpu.dimension_semantics<parallel>], iteration_bounds = array<i64: 1, 1>, scalar_prefetch = 0 : i64, scratch_operands = 0 : i64, tpu.core_type = #tpu.core_type<tc>, window_params = [{transform_indices = @transform_0, window_bounds = array<i64: 8, 256>}, {transform_indices = @transform_1, window_bounds = array<i64: 256, 128>}, {transform_indices = @transform_2, window_bounds = array<i64: 1, 128>}, {transform_indices = @transform_3, window_bounds = array<i64: 8, 128>}]} {
    %c0 = arith.constant 0 : index
    %c0_0 = arith.constant 0 : index
    %0 = vector.load %arg2[%c0, %c0_0] : memref<8x256xf32, #tpu.memory_space<vmem>>, vector<8x256xf32>
    %c0_1 = arith.constant 0 : index
    %c0_2 = arith.constant 0 : index
    %1 = vector.load %arg3[%c0_1, %c0_2] : memref<256x128xf32, #tpu.memory_space<vmem>>, vector<256x128xf32>
    %cst = arith.constant dense<0.000000e+00> : vector<8x128xf32>
    %2 = tpu.matmul %0, %1, %cst {dimension_numbers = #tpu.dot_dimension_numbers<[1], [0], [0], [1], [0, 0, 1, 1], [], []>} : vector<8x256xf32>, vector<256x128xf32>, vector<8x128xf32> -> vector<8x128xf32>
    %c0_3 = arith.constant 0 : index
    %c0_4 = arith.constant 0 : index
    %3 = vector.load %arg4[%c0_3, %c0_4] : memref<1x128xf32, #tpu.memory_space<vmem>>, vector<1x128xf32>
    %4 = vector.broadcast %3 : vector<1x128xf32> to vector<8x128xf32>
    %5 = arith.addf %2, %4 : vector<8x128xf32>
    %c0_5 = arith.constant 0 : index
    %c0_6 = arith.constant 0 : index
    %6 = vector.load %arg5[%c0_5, %c0_6] : memref<8x128xf32, #tpu.memory_space<vmem>>, vector<8x128xf32>
    tpu.vector_store %arg5[%c0_5, %c0_6], %5 {strides = array<i32>} : memref<8x128xf32, #tpu.memory_space<vmem>>, vector<8x128xf32>,
    return
  }
  func.func @transform_0(%arg0: i32, %arg1: i32) -> (i32, i32) {
    %c0_i32 = arith.constant 0 : i32
    %c0_i32_0 = arith.constant 0 : i32
    return %arg0, %c0_i32 : i32, i32
  }
  func.func @transform_1(%arg0: i32, %arg1: i32) -> (i32, i32) {
    %c0_i32 = arith.constant 0 : i32
    %c0_i32_0 = arith.constant 0 : i32
    return %c0_i32, %arg1 : i32, i32
  }
  func.func @transform_2(%arg0: i32, %arg1: i32) -> (i32, i32) {
    %c0_i32 = arith.constant 0 : i32
    %c0_i32_0 = arith.constant 0 : i32
    return %c0_i32, %arg1 : i32, i32
  }
  func.func @transform_3(%arg0: i32, %arg1: i32) -> (i32, i32) {
    %c0_i32 = arith.constant 0 : i32
    return %arg0, %arg1 : i32, i32
  }
}

</mosaic_0001>

<llo_original>
// kernel: tpu_custom_call.1
$region0: #{tpu_custom_call.1}
  #allocation0 [shape = 'u32[]', space=smem, size = 0x4, offset = 0x4, fixed_abs, tag = 'smem constant byte address 0x4 - core index']
  #allocation1 [shape = 'u32[72,128]{1,0:T(1,128)}', space=vmem, size = 0x9000, scoped, tag = 'internal scratch']
  %s0 = inlined_call_operand.hbm [shape: f32[8,256], index: 0, kind: input, shape index: {}]
  %s1 = inlined_call_operand.hbm [shape: f32[256,128], index: 1, kind: input, shape index: {}]
  %s2 = inlined_call_operand.vmem [shape: f32[1,128], index: 2, kind: input, shape index: {}]
  %s3 = inlined_call_operand.hbm [shape: f32[8,128], index: 3, kind: output, shape index: {}]
  %s4 = sld [smem:[#allocation0]]
  $region30: #{tpu_custom_call.1} parent=0
    _
  %s6 = ssub.s32 1, %s4
  %s7 = scalar_select 0, %s6, %s4
  $region1: #{tpu_custom_call.1} parent=0
    #allocation2 [shape = 'u8[8192]{0}', space=vmem, size = 0x2000, scoped, tag = 'input window, operand 0, single buffered']
    #allocation3 [shape = 's32[1]{0}', space=sflag, size = 0x4, scoped, tag = 'scoped memory for tpu_custom_call.1']
    #allocation4 [shape = 's32[1]{0}', space=sflag, size = 0x4, scoped, tag = 'scoped memory for tpu_custom_call.1']
    #allocation5 [shape = 'u8[131072]{0}', space=vmem, size = 0x20000, scoped, tag = 'input window, operand 1, single buffered']
    #allocation6 [shape = 's32[1]{0}', space=sflag, size = 0x4, scoped, tag = 'scoped memory for tpu_custom_call.1']
    #allocation7 [shape = 'u8[4096]{0}', space=vmem, size = 0x1000, scoped, tag = 'output window, operand 0, single buffered']
    %8 = vsyncpa [#allocation3], 0
    %9 = vsyncpa [#allocation6], 0
    %10 = vsyncpa [#allocation4], 0
    // Predicated region
    $region2: #{tpu_custom_call.1} parent=1 // pred_check
      _
    $region3: #{tpu_custom_call.1} parent=1 // pred_check_branch
      %12 = sbr.rel (0) target = $region5
    $region4: #{tpu_custom_call.1} parent=1 // pred_region
      %14 = vsyncadd [#allocation3], 0
      %s16 = sshll.u32 %s0, 4
      %s17 = int_to_ptr.hbm [resolvable:$true] %s16
      %s18 = sshll.u32 [#allocation2], 4
      %s19 = int_to_ptr.vmem [resolvable:$true] %s18
      %21 = dma.hbm_to_vmem [thread:$0]  %s17, 256, %s19, [#allocation3]
    $region5: #{tpu_custom_call.1} parent=1 // pred_fallthru
      _
    // Predicated region
    $region6: #{tpu_custom_call.1} parent=1 // pred_check
      _
    $region7: #{tpu_custom_call.1} parent=1 // pred_check_branch
      %23 = sbr.rel (0) target = $region9
    $region8: #{tpu_custom_call.1} parent=1 // pred_region
      %25 = vsyncadd [#allocation6], 0
      %s26 = sshll.u32 %s1, 4
      %s27 = int_to_ptr.hbm [resolvable:$true] %s26
      %s28 = sshll.u32 [#allocation5], 4
      %s29 = int_to_ptr.vmem [resolvable:$true] %s28
      %34 = dma.hbm_to_vmem [thread:$0]  %s27, 4096, %s29, [#allocation6], 128, 128, 8
    $region9: #{tpu_custom_call.1} parent=1 // pred_fallthru
      _
    // Predicated region
    $region10: #{tpu_custom_call.1} parent=1 // pred_check
      _
    $region11: #{tpu_custom_call.1} parent=1 // pred_check_branch
      %36 = sbr.rel (0) target = $region13
    $region12: #{tpu_custom_call.1} parent=1 // pred_region
      _
    $region13: #{tpu_custom_call.1} parent=1 // pred_fallthru
      _
    // Predicated region
    $region14: #{tpu_custom_call.1} parent=1 // pred_check
      _
    $region15: #{tpu_custom_call.1} parent=1 // pred_check_branch
      %38 = sbr.rel (0) target = $region17
    $region16: #{tpu_custom_call.1} parent=1 // pred_region
      %40 = dma.done [#allocation3], 256
    $region17: #{tpu_custom_call.1} parent=1 // pred_fallthru
      _
    // Predicated region
    $region18: #{tpu_custom_call.1} parent=1 // pred_check
      _
    $region19: #{tpu_custom_call.1} parent=1 // pred_check_branch
      %42 = sbr.rel (0) target = $region21
    $region20: #{tpu_custom_call.1} parent=1 // pred_region
      %44 = dma.done [#allocation6], 4096
    $region21: #{tpu_custom_call.1} parent=1 // pred_fallthru
      _
    %v45 = vld [vmem:[#allocation2] sm:$0xff]
    %v46 = vld [vmem:[#allocation2 + $0x8] sm:$0xff]
    %v47 = vld [vmem:[#allocation5] sm:$0xff]
    %v48 = vld [vmem:[#allocation5 + $0x8] sm:$0xff]
    %v49 = vld [vmem:[#allocation5 + $0x10] sm:$0xff]
    %v50 = vld [vmem:[#allocation5 + $0x18] sm:$0xff]
    %v51 = vld [vmem:[#allocation5 + $0x20] sm:$0xff]
    %v52 = vld [vmem:[#allocation5 + $0x28] sm:$0xff]
    %v53 = vld [vmem:[#allocation5 + $0x30] sm:$0xff]
    %v54 = vld [vmem:[#allocation5 + $0x38] sm:$0xff]
    %v55 = vld [vmem:[#allocation5 + $0x40] sm:$0xff]
    %v56 = vld [vmem:[#allocation5 + $0x48] sm:$0xff]
    %v57 = vld [vmem:[#allocation5 + $0x50] sm:$0xff]
    %v58 = vld [vmem:[#allocation5 + $0x58] sm:$0xff]
    %v59 = vld [vmem:[#allocation5 + $0x60] sm:$0xff]
    %v60 = vld [vmem:[#allocation5 + $0x68] sm:$0xff]
    %v61 = vld [vmem:[#allocation5 + $0x70] sm:$0xff]
    %v62 = vld [vmem:[#allocation5 + $0x78] sm:$0xff]
    %v63 = vld [vmem:[#allocation5 + $0x80] sm:$0xff]
    %v64 = vld [vmem:[#allocation5 + $0x88] sm:$0xff]
    %v65 = vld [vmem:[#allocation5 + $0x90] sm:$0xff]
    %v66 = vld [vmem:[#allocation5 + $0x98] sm:$0xff]
    %v67 = vld [vmem:[#allocation5 + $0xa0] sm:$0xff]
    %v68 = vld [vmem:[#allocation5 + $0xa8] sm:$0xff]
    %v69 = vld [vmem:[#allocation5 + $0xb0] sm:$0xff]
    %v70 = vld [vmem:[#allocation5 + $0xb8] sm:$0xff]
    %v71 = vld [vmem:[#allocation5 + $0xc0] sm:$0xff]
    %v72 = vld [vmem:[#allocation5 + $0xc8] sm:$0xff]
    %v73 = vld [vmem:[#allocation5 + $0xd0] sm:$0xff]
    %v74 = vld [vmem:[#allocation5 + $0xd8] sm:$0xff]
    %v75 = vld [vmem:[#allocation5 + $0xe0] sm:$0xff]
    %v76 = vld [vmem:[#allocation5 + $0xe8] sm:$0xff]
    %v77 = vld [vmem:[#allocation5 + $0xf0] sm:$0xff]
    %v78 = vld [vmem:[#allocation5 + $0xf8] sm:$0xff]
    %v79 = vld [vmem:[%s2] sm:$0x1]
    %v81 = vperm.slane %v79, 0
    %83 = vmatpush.msra.mxu0 %v62
    %84 = vmatpush.msra.mxu0 %v61
    %85 = vmatpush.msra.mxu0 %v60
    %86 = vmatpush.msra.mxu0 %v59
    %87 = vmatpush.msra.mxu0 %v58
    %88 = vmatpush.msra.mxu0 %v57
    %89 = vmatpush.msra.mxu0 %v56
    %90 = vmatpush.msra.mxu0 %v55
    %91 = vmatpush.msra.mxu0 %v54
    %92 = vmatpush.msra.mxu0 %v53
    %93 = vmatpush.msra.mxu0 %v52
    %94 = vmatpush.msra.mxu0 %v51
    %95 = vmatpush.msra.mxu0 %v50
    %96 = vmatpush.msra.mxu0 %v49
    %97 = vmatpush.msra.mxu0 %v48
    %98 = vmatpush.msra.mxu0 %v47
    %99 = vmatmul.f32.gmra.mxu0 %v45
    %v100 = vpop.f32.mrf.mxu0
    %v101 = vadd.f32 %v81, %v100
    %102 = vdwg.mxu0
    %103 = vmatpush.msra.mxu0 %v78
    %104 = vmatpush.msra.mxu0 %v77
    %105 = vmatpush.msra.mxu0 %v76
    %106 = vmatpush.msra.mxu0 %v75
    %107 = vmatpush.msra.mxu0 %v74
    %108 = vmatpush.msra.mxu0 %v73
    %109 = vmatpush.msra.mxu0 %v72
    %110 = vmatpush.msra.mxu0 %v71
    %111 = vmatpush.msra.mxu0 %v70
    %112 = vmatpush.msra.mxu0 %v69
    %113 = vmatpush.msra.mxu0 %v68
    %114 = vmatpush.msra.mxu0 %v67
    %115 = vmatpush.msra.mxu0 %v66
    %116 = vmatpush.msra.mxu0 %v65
    %117 = vmatpush.msra.mxu0 %v64
    %118 = vmatpush.msra.mxu0 %v63
    %119 = vmatmul.f32.gmra.mxu0 %v46
    %v120 = vpop.f32.mrf.mxu0
    %v121 = vadd.f32 %v101, %v120
    %122 = vdwg.mxu0
    %123 = vst [vmem:[#allocation7] sm:$0xff] %v121
    // Predicated region
    $region22: #{tpu_custom_call.1} parent=1 // pred_check
      _
    $region23: #{tpu_custom_call.1} parent=1 // pred_check_branch
      %125 = sbr.rel (0) target = $region25
    $region24: #{tpu_custom_call.1} parent=1 // pred_region
      %127 = vsyncadd [#allocation4], 0
      %s129 = sshll.u32 [#allocation7], 4
      %s130 = int_to_ptr.vmem [resolvable:$true] %s129
      %s131 = sshll.u32 %s3, 4
      %s132 = int_to_ptr.hbm [resolvable:$true] %s131
      %134 = dma.vmem_to_hbm [thread:$0]  %s130, 128, %s132, [#allocation4]
    $region25: #{tpu_custom_call.1} parent=1 // pred_fallthru
      _
    // Predicated region
    $region26: #{tpu_custom_call.1} parent=1 // pred_check
      _
    $region27: #{tpu_custom_call.1} parent=1 // pred_check_branch
      %136 = sbr.rel (0) target = $region29
    $region28: #{tpu_custom_call.1} parent=1 // pred_region
      %138 = dma.done [#allocation4], 128
    $region29: #{tpu_custom_call.1} parent=1 // pred_fallthru
      _
    %139 = vsyncpa [#allocation3], 1
    %140 = vsyncpa [#allocation6], 1
    %141 = vsyncpa [#allocation4], 1

</llo_original>
